<compile_context>
chip_gen: v7x
topology: tpu7x:2x2x1
jax: 0.10.0
libtpu: 0.0.40
codegen_flags: <defaults>
</compile_context>

<pallas_src>
import jax
import jax.numpy as jnp
from jax.experimental import pallas as pl
from jax.experimental.pallas import tpu as pltpu

EPS = 1e-5
LANE = 128
SUBLANE = 8


def _round_up(n, m):
    return ((n + m - 1) // m) * m


def _bn_train(h, gamma, beta):
    """Training-mode BatchNorm1d (per-batch stats, biased variance, eps=1e-5).

    Centered form (matches torch numerics, no E[h^2]-mean^2 cancellation).
    Zero-padded lanes (gamma = beta = 0) stay exactly zero because gamma scales
    the centered term and beta is the only additive contribution.
    """
    mean = jnp.mean(h, axis=0, keepdims=True)
    c = h - mean
    var = jnp.mean(c * c, axis=0, keepdims=True)
    s = gamma * jax.lax.rsqrt(var + EPS)
    return c * s + beta


def mlp_kernel(x_ref, w_ref, v_ref, o_ref):
    # x_ref: (B, d0)    unpadded input features (d0 is a sublane multiple)
    # w_ref: (3, P, P)  zero-padded f32 weight slab (layer 1 / layer 2 / output)
    # v_ref: (8, P)     rows: [g1, be1, g2, be2, b3, 0, 0, 0]
    # o_ref: (B, P)     lane-dense output slab (cols >= n_classes are zero)
    x = x_ref[...]
    d0 = x_ref.shape[1]

    # Layer 1: Linear (bias dropped: cancelled by training-mode BN) -> BN -> ReLU.
    # Static sublane slice of the weight slab (d0 % 8 == 0 => free view, no pad op
    # needed on x in the wrapper).
    h = jnp.dot(x, w_ref[0, :d0, :], preferred_element_type=jnp.float32)
    h = _bn_train(h, v_ref[0:1, :], v_ref[1:2, :])
    h = jnp.maximum(h, 0.0)

    # Layer 2: Linear (bias dropped) -> BN -> Tanh
    h = jnp.dot(h, w_ref[1], preferred_element_type=jnp.float32)
    h = _bn_train(h, v_ref[2:3, :], v_ref[3:4, :])
    h = jnp.tanh(h)

    # Output layer: Linear with bias; lane-dense (B, P) store (padded lanes stay 0).
    out = jnp.dot(h, w_ref[2], preferred_element_type=jnp.float32) + v_ref[4:5, :]
    o_ref[...] = out.astype(o_ref.dtype)


def pack_params(params, network_shape, n_classes):
    """Pack 10 torch-style parameter arrays into 2 lane-dense f32 slabs."""
    (w1, b1, g1, be1, w2, b2, g2, be2, w3, b3) = params
    del b1, b2  # dead: a bias before training-mode BatchNorm is cancelled by mean subtraction
    d0, d1, d2 = network_shape
    pad = _round_up(max(d0, d1, d2, n_classes), LANE)

    W = jnp.zeros((3, pad, pad), jnp.float32)
    W = W.at[0, :d0, :d1].set(w1)
    W = W.at[1, :d1, :d2].set(w2)
    W = W.at[2, :d2, :n_classes].set(w3)

    V = jnp.zeros((8, pad), jnp.float32)
    V = V.at[0, :d1].set(g1[0])
    V = V.at[1, :d1].set(be1[0])
    V = V.at[2, :d2].set(g2[0])
    V = V.at[3, :d2].set(be2[0])
    V = V.at[4, :n_classes].set(b3[0])
    return W, V


def mlp_regressor_forward(x, W, V):
    """Fused forward pass.

    Returns the lane-dense (B, P) output slab; real logits live in
    out[:, :n_classes].  The consumer slices lazily, so no pad/slice XLA ops
    are forced around the custom call.
    """
    B, d0 = x.shape
    pad = W.shape[-1]
    if d0 % SUBLANE:  # keep the layer-1 weight slice sublane-aligned (no-op for d0=32)
        x = jnp.pad(x, ((0, 0), (0, _round_up(d0, SUBLANE) - d0)))
        d0 = x.shape[1]

    # Advisory cost hint for XLA's scheduler (tiny, overlappable op).
    flops = 2 * B * d0 * pad + 2 * 2 * B * pad * pad
    transcendentals = B * pad + 2 * pad            # tanh + rsqrt
    bytes_accessed = 4 * (W.size + V.size + x.size + B * pad)

    return pl.pallas_call(
        mlp_kernel,
        out_shape=jax.ShapeDtypeStruct((B, pad), jnp.float32),
        in_specs=[
            pl.BlockSpec(memory_space=pltpu.MemorySpace.VMEM),  # x (full-array block)
            pl.BlockSpec(memory_space=pltpu.MemorySpace.VMEM),  # weight slab
            pl.BlockSpec(memory_space=pltpu.MemorySpace.VMEM),  # vector slab
        ],
        out_specs=pl.BlockSpec(memory_space=pltpu.MemorySpace.VMEM),
        compiler_params=pltpu.CompilerParams(vmem_limit_bytes=2 * 1024 * 1024),
        cost_estimate=pl.CostEstimate(
            flops=flops,
            transcendentals=transcendentals,
            bytes_accessed=bytes_accessed,
        ),
    )(x, W, V)


def make_params(key, network_shape, n_classes):
    d0, d1, d2 = network_shape
    k = jax.random.split(key, 6)

    def lin(kw, kb, fan_in, fan_out):
        bound = 1.0 / jnp.sqrt(jnp.float32(fan_in))
        w = jax.random.uniform(kw, (fan_in, fan_out), jnp.float32, -bound, bound)
        b = jax.random.uniform(kb, (1, fan_out), jnp.float32, -bound, bound)
        return w, b

    w1, b1 = lin(k[0], k[1], d0, d1)
    w2, b2 = lin(k[2], k[3], d1, d2)
    w3, b3 = lin(k[4], k[5], d2, n_classes)

    # BatchNorm1d affine params: weight=1, bias=0 (PyTorch default init).
    g1, be1 = jnp.ones((1, d1), jnp.float32), jnp.zeros((1, d1), jnp.float32)
    g2, be2 = jnp.ones((1, d2), jnp.float32), jnp.zeros((1, d2), jnp.float32)
    return (w1, b1, g1, be1, w2, b2, g2, be2, w3, b3)


def reference_forward(x, params):
    # Faithful torch-semantics reference, INCLUDING the pre-BN Linear biases
    # (they cancel inside training-mode BN, which is what the kernel exploits).
    (w1, b1, g1, be1, w2, b2, g2, be2, w3, b3) = params

    def bn(h, g, be):
        m = jnp.mean(h, axis=0, keepdims=True)
        v = jnp.mean((h - m) ** 2, axis=0, keepdims=True)
        return (h - m) / jnp.sqrt(v + EPS) * g + be

    h = jnp.maximum(bn(x @ w1 + b1, g1, be1), 0.0)
    h = jnp.tanh(bn(h @ w2 + b2, g2, be2))
    return h @ w3 + b3


if __name__ == "__main__":
    network_shape = (32, 64, 48)
    n_classes = 4
    batch = 8  # TODO(synk): stack many samples into one call in production; B up to ~1-2K still fits one block.

    key = jax.random.PRNGKey(0)
    kx, kp = jax.random.split(key)
    x = jax.random.normal(kx, (batch, network_shape[0]), jnp.float32)
    params = make_params(kp, network_shape, n_classes)

    W, V = pack_params(params, network_shape, n_classes)

    out_pad = mlp_regressor_forward(x, W, V)
    out_pad = jax.block_until_ready(out_pad)

    out = out_pad[:, :n_classes]  # consumer-side lazy slice of the lane-dense slab
    ref = reference_forward(x, params)
    assert out.shape == (batch, n_classes)
    assert jnp.allclose(out, ref, atol=2e-4, rtol=2e-4), "mismatch vs JAX reference"

    print("KERNEL_OK")
</pallas_src>

<mosaic_0001>
module attributes {stable_mosaic.version = 11 : i64} {
  func.func @mlp_kernel(%arg0: memref<8x32xf32, #tpu.memory_space<vmem>>, %arg1: memref<3x128x128xf32, #tpu.memory_space<vmem>>, %arg2: memref<8x128xf32, #tpu.memory_space<vmem>>, %arg3: memref<8x128xf32, #tpu.memory_space<vmem>>) attributes {dimension_semantics = [], scalar_prefetch = 0 : i64, scratch_operands = 0 : i64, tpu.core_type = #tpu.core_type<tc>} {
    %c0 = arith.constant 0 : index
    %c0_0 = arith.constant 0 : index
    %0 = vector.load %arg0[%c0, %c0_0] : memref<8x32xf32, #tpu.memory_space<vmem>>, vector<8x32xf32>
    %c0_1 = arith.constant 0 : index
    %c0_2 = arith.constant 0 : index
    %c0_3 = arith.constant 0 : index
    %1 = vector.load %arg1[%c0_1, %c0_2, %c0_3] : memref<3x128x128xf32, #tpu.memory_space<vmem>>, vector<1x32x128xf32>
    %2 = vector.shape_cast %1 : vector<1x32x128xf32> to vector<32x128xf32>
    %cst = arith.constant dense<0.000000e+00> : vector<8x128xf32>
    %3 = tpu.matmul %0, %2, %cst {dimension_numbers = #tpu.dot_dimension_numbers<[1], [0], [0], [1], [0, 0, 1, 1], [], []>} : vector<8x32xf32>, vector<32x128xf32>, vector<8x128xf32> -> vector<8x128xf32>
    %c0_4 = arith.constant 0 : index
    %c0_5 = arith.constant 0 : index
    %4 = vector.load %arg2[%c0_4, %c0_5] : memref<8x128xf32, #tpu.memory_space<vmem>>, vector<1x128xf32>
    %c1 = arith.constant 1 : index
    %c0_6 = arith.constant 0 : index
    %5 = vector.load %arg2[%c1, %c0_6] : memref<8x128xf32, #tpu.memory_space<vmem>>, vector<1x128xf32>
    %cst_7 = arith.constant dense<0.000000e+00> : vector<128xf32>
    %6 = vector.multi_reduction <add>, %3, %cst_7 [0] : vector<8x128xf32> to vector<128xf32>
    %7 = vector.shape_cast %6 : vector<128xf32> to vector<1x128xf32>
    %cst_8 = arith.constant 8.000000e+00 : f32
    %8 = vector.broadcast %cst_8 : f32 to vector<1x128xf32>
    %9 = arith.divf %7, %8 : vector<1x128xf32>
    %10 = vector.broadcast %9 : vector<1x128xf32> to vector<8x128xf32>
    %11 = arith.subf %3, %10 : vector<8x128xf32>
    %12 = arith.mulf %11, %11 : vector<8x128xf32>
    %cst_9 = arith.constant dense<0.000000e+00> : vector<128xf32>
    %13 = vector.multi_reduction <add>, %12, %cst_9 [0] : vector<8x128xf32> to vector<128xf32>
    %14 = vector.shape_cast %13 : vector<128xf32> to vector<1x128xf32>
    %cst_10 = arith.constant 8.000000e+00 : f32
    %15 = vector.broadcast %cst_10 : f32 to vector<1x128xf32>
    %16 = arith.divf %14, %15 : vector<1x128xf32>
    %cst_11 = arith.constant 9.99999974E-6 : f32
    %17 = vector.broadcast %cst_11 : f32 to vector<1x128xf32>
    %18 = arith.addf %16, %17 : vector<1x128xf32>
    %19 = math.rsqrt %18 : vector<1x128xf32>
    %20 = arith.mulf %4, %19 : vector<1x128xf32>
    %21 = vector.broadcast %20 : vector<1x128xf32> to vector<8x128xf32>
    %22 = arith.mulf %11, %21 : vector<8x128xf32>
    %23 = vector.broadcast %5 : vector<1x128xf32> to vector<8x128xf32>
    %24 = arith.addf %22, %23 : vector<8x128xf32>
    %cst_12 = arith.constant 0.000000e+00 : f32
    %25 = vector.broadcast %cst_12 : f32 to vector<8x128xf32>
    %26 = arith.maximumf %24, %25 : vector<8x128xf32>
    %c1_13 = arith.constant 1 : index
    %c0_14 = arith.constant 0 : index
    %c0_15 = arith.constant 0 : index
    %27 = vector.load %arg1[%c1_13, %c0_14, %c0_15] : memref<3x128x128xf32, #tpu.memory_space<vmem>>, vector<1x128x128xf32>
    %28 = vector.shape_cast %27 : vector<1x128x128xf32> to vector<128x128xf32>
    %cst_16 = arith.constant dense<0.000000e+00> : vector<8x128xf32>
    %29 = tpu.matmul %26, %28, %cst_16 {dimension_numbers = #tpu.dot_dimension_numbers<[1], [0], [0], [1], [0, 0, 1, 1], [], []>} : vector<8x128xf32>, vector<128x128xf32>, vector<8x128xf32> -> vector<8x128xf32>
    %c2 = arith.constant 2 : index
    %c0_17 = arith.constant 0 : index
    %30 = vector.load %arg2[%c2, %c0_17] : memref<8x128xf32, #tpu.memory_space<vmem>>, vector<1x128xf32>
    %c3 = arith.constant 3 : index
    %c0_18 = arith.constant 0 : index
    %31 = vector.load %arg2[%c3, %c0_18] : memref<8x128xf32, #tpu.memory_space<vmem>>, vector<1x128xf32>
    %cst_19 = arith.constant dense<0.000000e+00> : vector<128xf32>
    %32 = vector.multi_reduction <add>, %29, %cst_19 [0] : vector<8x128xf32> to vector<128xf32>
    %33 = vector.shape_cast %32 : vector<128xf32> to vector<1x128xf32>
    %cst_20 = arith.constant 8.000000e+00 : f32
    %34 = vector.broadcast %cst_20 : f32 to vector<1x128xf32>
    %35 = arith.divf %33, %34 : vector<1x128xf32>
    %36 = vector.broadcast %35 : vector<1x128xf32> to vector<8x128xf32>
    %37 = arith.subf %29, %36 : vector<8x128xf32>
    %38 = arith.mulf %37, %37 : vector<8x128xf32>
    %cst_21 = arith.constant dense<0.000000e+00> : vector<128xf32>
    %39 = vector.multi_reduction <add>, %38, %cst_21 [0] : vector<8x128xf32> to vector<128xf32>
    %40 = vector.shape_cast %39 : vector<128xf32> to vector<1x128xf32>
    %cst_22 = arith.constant 8.000000e+00 : f32
    %41 = vector.broadcast %cst_22 : f32 to vector<1x128xf32>
    %42 = arith.divf %40, %41 : vector<1x128xf32>
    %cst_23 = arith.constant 9.99999974E-6 : f32
    %43 = vector.broadcast %cst_23 : f32 to vector<1x128xf32>
    %44 = arith.addf %42, %43 : vector<1x128xf32>
    %45 = math.rsqrt %44 : vector<1x128xf32>
    %46 = arith.mulf %30, %45 : vector<1x128xf32>
    %47 = vector.broadcast %46 : vector<1x128xf32> to vector<8x128xf32>
    %48 = arith.mulf %37, %47 : vector<8x128xf32>
    %49 = vector.broadcast %31 : vector<1x128xf32> to vector<8x128xf32>
    %50 = arith.addf %48, %49 : vector<8x128xf32>
    %51 = math.tanh %50 : vector<8x128xf32>
    %c2_24 = arith.constant 2 : index
    %c0_25 = arith.constant 0 : index
    %c0_26 = arith.constant 0 : index
    %52 = vector.load %arg1[%c2_24, %c0_25, %c0_26] : memref<3x128x128xf32, #tpu.memory_space<vmem>>, vector<1x128x128xf32>
    %53 = vector.shape_cast %52 : vector<1x128x128xf32> to vector<128x128xf32>
    %cst_27 = arith.constant dense<0.000000e+00> : vector<8x128xf32>
    %54 = tpu.matmul %51, %53, %cst_27 {dimension_numbers = #tpu.dot_dimension_numbers<[1], [0], [0], [1], [0, 0, 1, 1], [], []>} : vector<8x128xf32>, vector<128x128xf32>, vector<8x128xf32> -> vector<8x128xf32>
    %c4 = arith.constant 4 : index
    %c0_28 = arith.constant 0 : index
    %55 = vector.load %arg2[%c4, %c0_28] : memref<8x128xf32, #tpu.memory_space<vmem>>, vector<1x128xf32>
    %56 = vector.broadcast %55 : vector<1x128xf32> to vector<8x128xf32>
    %57 = arith.addf %54, %56 : vector<8x128xf32>
    %c0_29 = arith.constant 0 : index
    %c0_30 = arith.constant 0 : index
    %58 = vector.load %arg3[%c0_29, %c0_30] : memref<8x128xf32, #tpu.memory_space<vmem>>, vector<8x128xf32>
    tpu.vector_store %arg3[%c0_29, %c0_30], %57 {strides = array<i32>} : memref<8x128xf32, #tpu.memory_space<vmem>>, vector<8x128xf32>,
    return
  }
}

</mosaic_0001>

<llo_original>
// kernel: tpu_custom_call.1
$region0: #{tpu_custom_call.1}
  #allocation0 [shape = 'u32[]', space=smem, size = 0x4, offset = 0x4, fixed_abs, tag = 'smem constant byte address 0x4 - core index']
  #allocation1 [shape = 'u32[144,128]{1,0:T(1,128)}', space=vmem, size = 0x12000, scoped, tag = 'internal scratch']
  %s0 = inlined_call_operand.hbm [shape: f32[8,32], index: 0, kind: input, shape index: {}]
  %s1 = inlined_call_operand.hbm [shape: f32[3,128,128], index: 1, kind: input, shape index: {}]
  %s2 = inlined_call_operand.hbm [shape: f32[8,128], index: 2, kind: input, shape index: {}]
  %s3 = inlined_call_operand.hbm [shape: f32[8,128], index: 3, kind: output, shape index: {}]
  %s4 = sld [smem:[#allocation0]]
  $region34: #{tpu_custom_call.1} parent=0
    _
  %s6 = ssub.s32 1, %s4
  %s7 = scalar_select 0, %s6, %s4
  $region1: #{tpu_custom_call.1} parent=0
    #allocation2 [shape = 'u8[4096]{0}', space=vmem, size = 0x1000, scoped, tag = 'input window, operand 0, single buffered']
    #allocation3 [shape = 's32[1]{0}', space=sflag, size = 0x4, scoped, tag = 'scoped memory for tpu_custom_call.1']
    #allocation4 [shape = 's32[1]{0}', space=sflag, size = 0x4, scoped, tag = 'scoped memory for tpu_custom_call.1']
    #allocation5 [shape = 'u8[196608]{0}', space=vmem, size = 0x30000, scoped, tag = 'input window, operand 1, single buffered']
    #allocation6 [shape = 's32[1]{0}', space=sflag, size = 0x4, scoped, tag = 'scoped memory for tpu_custom_call.1']
    #allocation7 [shape = 'u8[4096]{0}', space=vmem, size = 0x1000, scoped, tag = 'input window, operand 2, single buffered']
    #allocation8 [shape = 'u8[4096]{0}', space=vmem, size = 0x1000, scoped, tag = 'output window, operand 0, single buffered']
    %8 = vsyncpa [#allocation3], 0
    %9 = vsyncpa [#allocation6], 0
    %10 = vsyncpa [#allocation4], 0
    // Predicated region
    $region2: #{tpu_custom_call.1} parent=1 // pred_check
      _
    $region3: #{tpu_custom_call.1} parent=1 // pred_check_branch
      %12 = sbr.rel (0) target = $region5
    $region4: #{tpu_custom_call.1} parent=1 // pred_region
      %s14 = ssub.s32 128, 128
      %15 = vsyncadd [#allocation3], %s14
      %s17 = sshll.u32 [#allocation2], 4
      %s18 = int_to_ptr.vmem [resolvable:$true] %s17
      %20 = dma.hbm_to_vmem [thread:$0]  %s0, 128, %s18, [#allocation3]
    $region5: #{tpu_custom_call.1} parent=1 // pred_fallthru
      _
    // Predicated region
    $region6: #{tpu_custom_call.1} parent=1 // pred_check
      _
    $region7: #{tpu_custom_call.1} parent=1 // pred_check_branch
      %22 = sbr.rel (0) target = $region9
    $region8: #{tpu_custom_call.1} parent=1 // pred_region
      %s24 = ssub.s32 6144, 6144
      %25 = vsyncadd [#allocation6], %s24
      %s26 = sshll.u32 [#allocation5], 4
      %s27 = int_to_ptr.vmem [resolvable:$true] %s26
      %32 = dma.hbm_to_vmem [thread:$0]  %s1, 6144, %s27, [#allocation6], 128, 128, 8
    $region9: #{tpu_custom_call.1} parent=1 // pred_fallthru
      _
    // Predicated region
    $region10: #{tpu_custom_call.1} parent=1 // pred_check
      _
    $region11: #{tpu_custom_call.1} parent=1 // pred_check_branch
      %34 = sbr.rel (0) target = $region13
    $region12: #{tpu_custom_call.1} parent=1 // pred_region
      %s36 = ssub.s32 128, 128
      %37 = vsyncadd [#allocation6], %s36
      %s39 = sshll.u32 [#allocation7], 4
      %s40 = int_to_ptr.vmem [resolvable:$true] %s39
      %42 = dma.hbm_to_vmem [thread:$0]  %s2, 128, %s40, [#allocation6]
    $region13: #{tpu_custom_call.1} parent=1 // pred_fallthru
      _
    // Predicated region
    $region14: #{tpu_custom_call.1} parent=1 // pred_check
      _
    $region15: #{tpu_custom_call.1} parent=1 // pred_check_branch
      %44 = sbr.rel (0) target = $region17
    $region16: #{tpu_custom_call.1} parent=1 // pred_region
      %45 = dma.done [#allocation3], 128
    $region17: #{tpu_custom_call.1} parent=1 // pred_fallthru
      _
    // Predicated region
    $region18: #{tpu_custom_call.1} parent=1 // pred_check
      _
    $region19: #{tpu_custom_call.1} parent=1 // pred_check_branch
      %47 = sbr.rel (0) target = $region21
    $region20: #{tpu_custom_call.1} parent=1 // pred_region
      %48 = dma.done [#allocation6], 6144
    $region21: #{tpu_custom_call.1} parent=1 // pred_fallthru
      _
    // Predicated region
    $region22: #{tpu_custom_call.1} parent=1 // pred_check
      _
    $region23: #{tpu_custom_call.1} parent=1 // pred_check_branch
      %50 = sbr.rel (0) target = $region25
    $region24: #{tpu_custom_call.1} parent=1 // pred_region
      %51 = dma.done [#allocation6], 128
    $region25: #{tpu_custom_call.1} parent=1 // pred_fallthru
      _
    %v52 = vld [vmem:[#allocation2] sm:$0xff]
    %v53 = vld [vmem:[#allocation5] sm:$0xff]
    %v54 = vld [vmem:[#allocation5 + $0x8] sm:$0xff]
    %v55 = vld [vmem:[#allocation5 + $0x10] sm:$0xff]
    %v56 = vld [vmem:[#allocation5 + $0x18] sm:$0xff]
    %vm57 = vcmask 261120
    %v59 = vsel %vm57, %v52, 0
    %61 = vmatprep.subr.mxu0 0.0
    %62 = vmatpush1.msra.mxu0 %v53
    %63 = vmatprep.subr.mxu0 0.0
    %64 = vmatpush1.msra.mxu0 %v54
    %65 = vmatprep.subr.mxu0 0.0
    %66 = vmatpush1.msra.mxu0 %v55
    %67 = vmatprep.subr.mxu0 0.0
    %68 = vmatpush1.msra.mxu0 %v56
    %69 = vmatprep.subr.mxu0 0.0
    %70 = vmatpush1.msra.mxu0 0.0
    %71 = vmatprep.subr.mxu0 0.0
    %72 = vmatpush1.msra.mxu0 0.0
    %73 = vmatprep.subr.mxu0 0.0
    %74 = vmatpush1.msra.mxu0 0.0
    %75 = vmatprep.subr.mxu0 0.0
    %76 = vmatpush1.msra.mxu0 0.0
    %77 = vmatprep.subr.mxu0 0.0
    %78 = vmatpush1.msra.mxu0 0.0
    %79 = vmatprep.subr.mxu0 0.0
    %80 = vmatpush1.msra.mxu0 0.0
    %81 = vmatprep.subr.mxu0 0.0
    %82 = vmatpush1.msra.mxu0 0.0
    %83 = vmatprep.subr.mxu0 0.0
    %84 = vmatpush1.msra.mxu0 0.0
    %85 = vmatprep.subr.mxu0 0.0
    %86 = vmatpush1.msra.mxu0 0.0
    %87 = vmatprep.subr.mxu0 0.0
    %88 = vmatpush1.msra.mxu0 0.0
    %89 = vmatprep.subr.mxu0 0.0
    %90 = vmatpush1.msra.mxu0 0.0
    %91 = vmatprep.subr.mxu0 0.0
    %92 = vmatpush1.msra.mxu0 0.0
    %93 = vmatprep.subr.mxu0 0.0
    %94 = vmatpush1.msra.mxu0 0.0
    %95 = vmatprep.subr.mxu0 0.0
    %96 = vmatpush1.msra.mxu0 0.0
    %97 = vmatprep.subr.mxu0 0.0
    %98 = vmatpush1.msra.mxu0 0.0
    %99 = vmatprep.subr.mxu0 0.0
    %100 = vmatpush1.msra.mxu0 0.0
    %101 = vmatprep.subr.mxu0 0.0
    %102 = vmatpush1.msra.mxu0 0.0
    %103 = vmatprep.subr.mxu0 0.0
    %104 = vmatpush1.msra.mxu0 0.0
    %105 = vmatprep.subr.mxu0 0.0
    %106 = vmatpush1.msra.mxu0 0.0
    %107 = vmatprep.subr.mxu0 0.0
    %108 = vmatpush1.msra.mxu0 0.0
    %109 = vmatprep.subr.mxu0 0.0
    %110 = vmatpush1.msra.mxu0 0.0
    %111 = vmatprep.subr.mxu0 0.0
    %112 = vmatpush1.msra.mxu0 0.0
    %113 = vmatprep.subr.mxu0 0.0
    %114 = vmatpush1.msra.mxu0 0.0
    %115 = vmatprep.subr.mxu0 0.0
    %116 = vmatpush1.msra.mxu0 0.0
    %117 = vmatprep.subr.mxu0 0.0
    %118 = vmatpush1.msra.mxu0 0.0
    %119 = vmatprep.subr.mxu0 0.0
    %120 = vmatpush1.msra.mxu0 0.0
    %121 = vmatprep.subr.mxu0 0.0
    %122 = vmatpush1.msra.mxu0 0.0
    %123 = vmatprep.subr.mxu0 0.0
    %124 = vmatpush1.msra.mxu0 0.0
    %125 = vmatprep.mubr.f32.mxu0 0.0
    %126 = vmatmul.mubr.f32.gmra.mrb[0].mxu0 %v59
    %v127 = vpop.f32.mrb[0].mxu0
    %v128 = vadd.f32 0.0, %v127
    %v129 = vpop.f32.mrb[0].mxu0
    %130 = vdwg.mxu0
    %v131 = vld [vmem:[#allocation7] sm:$0x1]
    %v132 = vld [vmem:[#allocation7 + $0x1] sm:$0x1]
    %v133 = vrot.slane %v128, 4
    %v134 = vadd.f32 %v128, %v133
    %v135 = vrot.slane %v134, 2
    %v136 = vadd.f32 %v134, %v135
    %v137 = vrot.slane %v136, 1
    %v138 = vadd.f32 %v136, %v137
    %v139 = vrcp.pop 8.0
    %v140 = vmul.f32 %v138, %v139
    %v141 = vsub.f32 %v128, %v140
    %v142 = vmul.f32 %v141, %v141
    %v143 = vrot.slane %v142, 4
    %v144 = vadd.f32 %v142, %v143
    %v145 = vrot.slane %v144, 2
    %v146 = vadd.f32 %v144, %v145
    %v147 = vrot.slane %v146, 1
    %v148 = vadd.f32 %v146, %v147
    %v149 = vmul.f32 %v148, %v139
    %v150 = vadd.f32 %v149, 1e-05
    %v151 = vrsqrt.pop %v150
    %v152 = vmul.f32 %v131, %v151
    %v153 = vlaneseq
    %v154 = vshrl.u32 %v153, 7
    %v155 = vsub.s32 0, %v154
    %v156 = vrot.slane %v152, %v155
    %v157 = vmul.f32 %v141, %v156
    %v158 = vlaneseq
    %v159 = vshrl.u32 %v158, 7
    %v160 = vsub.s32 0, %v159
    %v161 = vrot.slane %v132, %v160
    %v162 = vadd.f32 %v157, %v161
    %v163 = vmax.f32 %v162, 0.0
    %s164 = scalar_lea.vmem [#allocation5], 128
    %v165 = vld [vmem:[%s164] sm:$0xff]
    %v166 = vld [vmem:[%s164 + $0x8] sm:$0xff]
    %v167 = vld [vmem:[%s164 + $0x10] sm:$0xff]
    %v168 = vld [vmem:[%s164 + $0x18] sm:$0xff]
    %v169 = vld [vmem:[%s164 + $0x20] sm:$0xff]
    %v170 = vld [vmem:[%s164 + $0x28] sm:$0xff]
    %v171 = vld [vmem:[%s164 + $0x30] sm:$0xff]
    %v172 = vld [vmem:[%s164 + $0x38] sm:$0xff]
    %v173 = vld [vmem:[%s164 + $0x40] sm:$0xff]
    %v174 = vld [vmem:[%s164 + $0x48] sm:$0xff]
    %v175 = vld [vmem:[%s164 + $0x50] sm:$0xff]
    %v176 = vld [vmem:[%s164 + $0x58] sm:$0xff]
    %v177 = vld [vmem:[%s164 + $0x60] sm:$0xff]
    %v178 = vld [vmem:[%s164 + $0x68] sm:$0xff]
    %v179 = vld [vmem:[%s164 + $0x70] sm:$0xff]
    %v180 = vld [vmem:[%s164 + $0x78] sm:$0xff]
    %181 = vmatprep.subr.mxu0 0.0
    %182 = vmatpush1.msra.mxu0 %v165
    %183 = vmatprep.subr.mxu0 0.0
    %184 = vmatpush1.msra.mxu0 %v166
    %185 = vmatprep.subr.mxu0 0.0
    %186 = vmatpush1.msra.mxu0 %v167
    %187 = vmatprep.subr.mxu0 0.0
    %188 = vmatpush1.msra.mxu0 %v168
    %189 = vmatprep.subr.mxu0 0.0
    %190 = vmatpush1.msra.mxu0 %v169
    %191 = vmatprep.subr.mxu0 0.0
    %192 = vmatpush1.msra.mxu0 %v170
    %193 = vmatprep.subr.mxu0 0.0
    %194 = vmatpush1.msra.mxu0 %v171
    %195 = vmatprep.subr.mxu0 0.0
    %196 = vmatpush1.msra.mxu0 %v172
    %197 = vmatprep.subr.mxu0 0.0
    %198 = vmatpush1.msra.mxu0 %v173
    %199 = vmatprep.subr.mxu0 0.0
    %200 = vmatpush1.msra.mxu0 %v174
    %201 = vmatprep.subr.mxu0 0.0
    %202 = vmatpush1.msra.mxu0 %v175
    %203 = vmatprep.subr.mxu0 0.0
    %204 = vmatpush1.msra.mxu0 %v176
    %205 = vmatprep.subr.mxu0 0.0
    %206 = vmatpush1.msra.mxu0 %v177
    %207 = vmatprep.subr.mxu0 0.0
    %208 = vmatpush1.msra.mxu0 %v178
    %209 = vmatprep.subr.mxu0 0.0
    %210 = vmatpush1.msra.mxu0 %v179
    %211 = vmatprep.subr.mxu0 0.0
    %212 = vmatpush1.msra.mxu0 %v180
    %213 = vmatprep.subr.mxu0 0.0
    %214 = vmatpush1.msra.mxu0 0.0
    %215 = vmatprep.subr.mxu0 0.0
    %216 = vmatpush1.msra.mxu0 0.0
    %217 = vmatprep.subr.mxu0 0.0
    %218 = vmatpush1.msra.mxu0 0.0
    %219 = vmatprep.subr.mxu0 0.0
    %220 = vmatpush1.msra.mxu0 0.0
    %221 = vmatprep.subr.mxu0 0.0
    %222 = vmatpush1.msra.mxu0 0.0
    %223 = vmatprep.subr.mxu0 0.0
    %224 = vmatpush1.msra.mxu0 0.0
    %225 = vmatprep.subr.mxu0 0.0
    %226 = vmatpush1.msra.mxu0 0.0
    %227 = vmatprep.subr.mxu0 0.0
    %228 = vmatpush1.msra.mxu0 0.0
    %229 = vmatprep.subr.mxu0 0.0
    %230 = vmatpush1.msra.mxu0 0.0
    %231 = vmatprep.subr.mxu0 0.0
    %232 = vmatpush1.msra.mxu0 0.0
    %233 = vmatprep.subr.mxu0 0.0
    %234 = vmatpush1.msra.mxu0 0.0
    %235 = vmatprep.subr.mxu0 0.0
    %236 = vmatpush1.msra.mxu0 0.0
    %237 = vmatprep.subr.mxu0 0.0
    %238 = vmatpush1.msra.mxu0 0.0
    %239 = vmatprep.subr.mxu0 0.0
    %240 = vmatpush1.msra.mxu0 0.0
    %241 = vmatprep.subr.mxu0 0.0
    %242 = vmatpush1.msra.mxu0 0.0
    %243 = vmatprep.subr.mxu0 0.0
    %244 = vmatpush1.msra.mxu0 0.0
    %245 = vmatprep.mubr.f32.mxu0 0.0
    %246 = vmatmul.mubr.f32.gmra.mrb[0].mxu0 %v163
    %v247 = vpop.f32.mrb[0].mxu0
    %v248 = vadd.f32 0.0, %v247
    %v249 = vpop.f32.mrb[0].mxu0
    %250 = vdwg.mxu0
    %v251 = vld [vmem:[#allocation7 + $0x2] sm:$0x1]
    %v252 = vld [vmem:[#allocation7 + $0x3] sm:$0x1]
    %v253 = vrot.slane %v248, 4
    %v254 = vadd.f32 %v248, %v253
    %v255 = vrot.slane %v254, 2
    %v256 = vadd.f32 %v254, %v255
    %v257 = vrot.slane %v256, 1
    %v258 = vadd.f32 %v256, %v257
    %v259 = vmul.f32 %v258, %v139
    %v260 = vsub.f32 %v248, %v259
    %v261 = vmul.f32 %v260, %v260
    %v262 = vrot.slane %v261, 4
    %v263 = vadd.f32 %v261, %v262
    %v264 = vrot.slane %v263, 2
    %v265 = vadd.f32 %v263, %v264
    %v266 = vrot.slane %v265, 1
    %v267 = vadd.f32 %v265, %v266
    %v268 = vmul.f32 %v267, %v139
    %v269 = vadd.f32 %v268, 1e-05
    %v270 = vrsqrt.pop %v269
    %v271 = vmul.f32 %v251, %v270
    %v272 = vlaneseq
    %v273 = vshrl.u32 %v272, 7
    %v274 = vsub.s32 0, %v273
    %v275 = vrot.slane %v271, %v274
    %v276 = vmul.f32 %v260, %v275
    %v277 = vlaneseq
    %v278 = vshrl.u32 %v277, 7
    %v279 = vsub.s32 0, %v278
    %v280 = vrot.slane %v252, %v279
    %v281 = vadd.f32 %v276, %v280
    %v282 = vtanh.pop %v281
    %s283 = scalar_lea.vmem [#allocation5], 256
    %v284 = vld [vmem:[%s283] sm:$0xff]
    %v285 = vld [vmem:[%s283 + $0x8] sm:$0xff]
    %v286 = vld [vmem:[%s283 + $0x10] sm:$0xff]
    %v287 = vld [vmem:[%s283 + $0x18] sm:$0xff]
    %v288 = vld [vmem:[%s283 + $0x20] sm:$0xff]
    %v289 = vld [vmem:[%s283 + $0x28] sm:$0xff]
    %v290 = vld [vmem:[%s283 + $0x30] sm:$0xff]
    %v291 = vld [vmem:[%s283 + $0x38] sm:$0xff]
    %v292 = vld [vmem:[%s283 + $0x40] sm:$0xff]
    %v293 = vld [vmem:[%s283 + $0x48] sm:$0xff]
    %v294 = vld [vmem:[%s283 + $0x50] sm:$0xff]
    %v295 = vld [vmem:[%s283 + $0x58] sm:$0xff]
    %v296 = vld [vmem:[%s283 + $0x60] sm:$0xff]
    %v297 = vld [vmem:[%s283 + $0x68] sm:$0xff]
    %v298 = vld [vmem:[%s283 + $0x70] sm:$0xff]
    %v299 = vld [vmem:[%s283 + $0x78] sm:$0xff]
    %v300 = vld [vmem:[#allocation7 + $0x4] sm:$0x1]
    %v301 = vlaneseq
    %v302 = vshrl.u32 %v301, 7
    %v303 = vsub.s32 0, %v302
    %v304 = vrot.slane %v300, %v303
    %305 = vmatprep.subr.mxu0 0.0
    %306 = vmatpush1.msra.mxu0 %v284
    %307 = vmatprep.subr.mxu0 0.0
    %308 = vmatpush1.msra.mxu0 %v285
    %309 = vmatprep.subr.mxu0 0.0
    %310 = vmatpush1.msra.mxu0 %v286
    %311 = vmatprep.subr.mxu0 0.0
    %312 = vmatpush1.msra.mxu0 %v287
    %313 = vmatprep.subr.mxu0 0.0
    %314 = vmatpush1.msra.mxu0 %v288
    %315 = vmatprep.subr.mxu0 0.0
    %316 = vmatpush1.msra.mxu0 %v289
    %317 = vmatprep.subr.mxu0 0.0
    %318 = vmatpush1.msra.mxu0 %v290
    %319 = vmatprep.subr.mxu0 0.0
    %320 = vmatpush1.msra.mxu0 %v291
    %321 = vmatprep.subr.mxu0 0.0
    %322 = vmatpush1.msra.mxu0 %v292
    %323 = vmatprep.subr.mxu0 0.0
    %324 = vmatpush1.msra.mxu0 %v293
    %325 = vmatprep.subr.mxu0 0.0
    %326 = vmatpush1.msra.mxu0 %v294
    %327 = vmatprep.subr.mxu0 0.0
    %328 = vmatpush1.msra.mxu0 %v295
    %329 = vmatprep.subr.mxu0 0.0
    %330 = vmatpush1.msra.mxu0 %v296
    %331 = vmatprep.subr.mxu0 0.0
    %332 = vmatpush1.msra.mxu0 %v297
    %333 = vmatprep.subr.mxu0 0.0
    %334 = vmatpush1.msra.mxu0 %v298
    %335 = vmatprep.subr.mxu0 0.0
    %336 = vmatpush1.msra.mxu0 %v299
    %337 = vmatprep.subr.mxu0 0.0
    %338 = vmatpush1.msra.mxu0 0.0
    %339 = vmatprep.subr.mxu0 0.0
    %340 = vmatpush1.msra.mxu0 0.0
    %341 = vmatprep.subr.mxu0 0.0
    %342 = vmatpush1.msra.mxu0 0.0
    %343 = vmatprep.subr.mxu0 0.0
    %344 = vmatpush1.msra.mxu0 0.0
    %345 = vmatprep.subr.mxu0 0.0
    %346 = vmatpush1.msra.mxu0 0.0
    %347 = vmatprep.subr.mxu0 0.0
    %348 = vmatpush1.msra.mxu0 0.0
    %349 = vmatprep.subr.mxu0 0.0
    %350 = vmatpush1.msra.mxu0 0.0
    %351 = vmatprep.subr.mxu0 0.0
    %352 = vmatpush1.msra.mxu0 0.0
    %353 = vmatprep.subr.mxu0 0.0
    %354 = vmatpush1.msra.mxu0 0.0
    %355 = vmatprep.subr.mxu0 0.0
    %356 = vmatpush1.msra.mxu0 0.0
    %357 = vmatprep.subr.mxu0 0.0
    %358 = vmatpush1.msra.mxu0 0.0
    %359 = vmatprep.subr.mxu0 0.0
    %360 = vmatpush1.msra.mxu0 0.0
    %361 = vmatprep.subr.mxu0 0.0
    %362 = vmatpush1.msra.mxu0 0.0
    %363 = vmatprep.subr.mxu0 0.0
    %364 = vmatpush1.msra.mxu0 0.0
    %365 = vmatprep.subr.mxu0 0.0
    %366 = vmatpush1.msra.mxu0 0.0
    %367 = vmatprep.subr.mxu0 0.0
    %368 = vmatpush1.msra.mxu0 0.0
    %369 = vmatprep.mubr.f32.mxu0 0.0
    %370 = vmatmul.mubr.f32.gmra.mrb[0].mxu0 %v282
    %v371 = vpop.f32.mrb[0].mxu0
    %v372 = vadd.f32 %v304, %v371
    %v373 = vpop.f32.mrb[0].mxu0
    %374 = vdwg.mxu0
    %375 = vst [vmem:[#allocation8] sm:$0xff] %v372
    // Predicated region
    $region26: #{tpu_custom_call.1} parent=1 // pred_check
      _
    $region27: #{tpu_custom_call.1} parent=1 // pred_check_branch
      %377 = sbr.rel (0) target = $region29
    $region28: #{tpu_custom_call.1} parent=1 // pred_region
      %s379 = ssub.s32 128, 128
      %380 = vsyncadd [#allocation4], %s379
      %s382 = sshll.u32 [#allocation8], 4
      %s383 = int_to_ptr.vmem [resolvable:$true] %s382
      %385 = dma.vmem_to_hbm [thread:$0]  %s383, 128, %s3, [#allocation4]
    $region29: #{tpu_custom_call.1} parent=1 // pred_fallthru
      _
    // Predicated region
    $region30: #{tpu_custom_call.1} parent=1 // pred_check
      _
    $region31: #{tpu_custom_call.1} parent=1 // pred_check_branch
      %387 = sbr.rel (0) target = $region33
    $region32: #{tpu_custom_call.1} parent=1 // pred_region
      %388 = dma.done [#allocation4], 128
    $region33: #{tpu_custom_call.1} parent=1 // pred_fallthru
      _
    %389 = vsyncpa [#allocation3], 1
    %390 = vsyncpa [#allocation6], 1
    %391 = vsyncpa [#allocation4], 1

</llo_original>
